<compile_context>
chip_gen: v5e
topology: v5e:2x2
jax: 0.10.0
libtpu: 0.0.40
codegen_flags: <defaults>
</compile_context>

<pallas_src>
import jax
import jax.numpy as jnp
from jax import lax
from jax.experimental import pallas as pl
from jax.experimental.pallas import tpu as pltpu


def dwconv_kernel(x_ref, xup_ref, xdn_ref, w_ref, b_ref, o_ref):
    # x_ref  : (Bt, Th, W, Ct)  row tile of the input
    # xup_ref: (Bt, 1,  W, Ct)  row just above the tile (clamped copy at the top edge)
    # xdn_ref: (Bt, 1,  W, Ct)  row just below the tile (clamped copy at the bottom edge)
    # w_ref  : (9, Ct)          depthwise taps, row di*3 + dj
    # b_ref  : (1, Ct)          bias
    # o_ref  : (Bt, Th, W, Ct)  output tile
    Bt, Th, W, C = o_ref.shape
    h_idx = pl.program_id(2)
    n_h = pl.num_programs(2)

    xc = x_ref[...]                                   # stays in input dtype (bf16 packed)

    # Halo rows from the neighbouring row tiles; zero them at the image border.
    up_valid = (h_idx > 0).astype(xc.dtype)
    dn_valid = (h_idx < n_h - 1).astype(xc.dtype)
    up_row = xup_ref[...] * up_valid                  # (Bt, 1, W, Ct)
    dn_row = xdn_ref[...] * dn_valid

    # Row-shifted views of the tile: leading-axis concatenate = slab placement only.
    if Th > 1:
        x_up = jnp.concatenate([up_row, xc[:, :Th - 1]], axis=1)   # x_up[:, h] = x[h-1]
        x_dn = jnp.concatenate([xc[:, 1:], dn_row], axis=1)        # x_dn[:, h] = x[h+1]
    else:
        x_up, x_dn = up_row, dn_row

    taps = [w_ref[k, :].astype(jnp.float32) for k in range(9)]     # (Ct,) each

    # Separable accumulation: column sums over the three row taps (f32 accumulate).
    def col_sum(dj):
        return (x_up * taps[0 * 3 + dj]
                + xc * taps[1 * 3 + dj]
                + x_dn * taps[2 * 3 + dj])

    s0 = col_sum(0)
    s1 = col_sum(1)
    s2 = col_sum(2)

    # W-direction halo: y[w] = S0[w-1] + S1[w] + S2[w+1]; two rolls + two selects.
    col = lax.broadcasted_iota(jnp.int32, (1, 1, W, C), 2)
    zf = jnp.zeros((), jnp.float32)
    s0_sh = jnp.where(col > 0, pltpu.roll(s0, 1, axis=2), zf)          # S0[w-1]
    s2_sh = jnp.where(col < W - 1, pltpu.roll(s2, W - 1, axis=2), zf)  # S2[w+1]

    acc = s1 + s0_sh + s2_sh + b_ref[0, :].astype(jnp.float32)
    o_ref[...] = acc.astype(o_ref.dtype)


def _largest_divisor_leq(n, cap):
    cap = int(max(1, min(n, cap)))
    for d in range(cap, 0, -1):
        if n % d == 0:
            return d
    return 1


def dwconv_pallas(x, weight, bias, H, W, *,
                  row_tile_target_bytes=1 << 20,
                  batch_fold_target_bytes=1 << 20):
    """x: (B, N, C) with N == H*W; weight: (3, 3, C); bias: (C,). Returns (B, N, C)."""
    B, N, C = x.shape
    assert N == H * W
    assert weight.shape == (3, 3, C)
    assert bias.shape == (C,)

    itemsize = x.dtype.itemsize

    # Channel tile: lane-dense 128 when C is a multiple of 128 (typical MixFFN hidden
    # dims), otherwise the full C (full-extent last dim keeps the BlockSpec legal).
    Ct = 128 if (C % 128 == 0) else C
    n_c = C // Ct

    # Row tiling: keep each (Bt, Th, W, Ct) block around row_tile_target_bytes.
    row_bytes = W * Ct * itemsize
    Th = _largest_divisor_leq(H, max(1, row_tile_target_bytes // max(row_bytes, 1)))
    n_h = H // Th

    # Small-image batch folding: amortize per-grid-step overhead when a whole image
    # tile is small; only when the image is not row-tiled.
    if Th == H and H * row_bytes < (512 << 10):
        Bt = _largest_divisor_leq(
            B, max(1, batch_fold_target_bytes // max(H * row_bytes, 1)))
    else:
        Bt = 1
    n_b = B // Bt

    x_nhwc = x.reshape(B, H, W, C)
    w9 = weight.reshape(9, C)          # taps at w9[di*3 + dj]
    b2 = bias.reshape(1, C)

    # VMEM budget: double-buffered in/out blocks + halo rows + weights, plus headroom
    # for the compiler-managed f32 temporaries (x_up/x_dn/s0/s1/s2/shifts/acc).
    blk = Bt * Th * W * Ct * itemsize
    halo = Bt * W * Ct * itemsize
    wb = 10 * Ct * itemsize
    f32_blk = Bt * Th * W * Ct * 4
    needed = 2 * (2 * blk + 2 * halo + wb) + 8 * f32_blk + (2 << 20)
    vmem_limit = int(min(max(needed, 8 << 20), 56 << 20))

    # Channels outermost -> weight/bias block index constant across consecutive steps.
    grid = (n_c, n_b, n_h)

    out_nhwc = pl.pallas_call(
        dwconv_kernel,
        out_shape=jax.ShapeDtypeStruct((B, H, W, C), x.dtype),
        grid_spec=pltpu.PrefetchScalarGridSpec(
            num_scalar_prefetch=0,
            grid=grid,
            in_specs=[
                pl.BlockSpec((Bt, Th, W, Ct), lambda c, b, h: (b, h, 0, c)),
                # 1-row halo just above the tile (clamped at the top edge, masked in-kernel)
                pl.BlockSpec((Bt, 1, W, Ct),
                             lambda c, b, h: (b, jnp.maximum(h * Th - 1, 0), 0, c)),
                # 1-row halo just below the tile (clamped at the bottom edge, masked in-kernel)
                pl.BlockSpec((Bt, 1, W, Ct),
                             lambda c, b, h: (b, jnp.minimum((h + 1) * Th, H - 1), 0, c)),
                pl.BlockSpec((9, Ct), lambda c, b, h: (0, c)),
                pl.BlockSpec((1, Ct), lambda c, b, h: (0, c)),
            ],
            out_specs=pl.BlockSpec((Bt, Th, W, Ct), lambda c, b, h: (b, h, 0, c)),
        ),
        compiler_params=pltpu.CompilerParams(
            dimension_semantics=("parallel", "parallel", "parallel"),
            vmem_limit_bytes=vmem_limit),
    )(x_nhwc, x_nhwc, x_nhwc, w9, b2)

    return out_nhwc.reshape(B, N, C)


def dwconv_reference(x, weight, bias, H, W):
    """Pure-JAX reference mirroring torch's grouped Conv2d (NCHW), f32 math."""
    B, N, C = x.shape
    x_nchw = jnp.transpose(x, (0, 2, 1)).reshape(B, C, H, W)
    w_oihw = jnp.transpose(weight, (2, 0, 1))[:, None, :, :]   # (C,1,3,3)
    y = lax.conv_general_dilated(
        x_nchw.astype(jnp.float32), w_oihw.astype(jnp.float32),
        window_strides=(1, 1), padding=((1, 1), (1, 1)),
        feature_group_count=C,
        dimension_numbers=("NCHW", "OIHW", "NCHW"))
    y = y + bias.astype(jnp.float32)[None, :, None, None]
    return jnp.transpose(y.reshape(B, C, N), (0, 2, 1))        # (B, N, C) f32


if __name__ == "__main__":
    root_key = jax.random.PRNGKey(0)

    def run_case(case_id, B, C, H, W, dtype, atol, rtol, **kw):
        N = H * W
        kx, kwt, kb = jax.random.split(jax.random.fold_in(root_key, case_id), 3)
        x = jax.random.normal(kx, (B, N, C), dtype=jnp.float32).astype(dtype)
        weight = (jax.random.normal(kwt, (3, 3, C), dtype=jnp.float32) * 0.1).astype(dtype)
        bias = (jax.random.normal(kb, (C,), dtype=jnp.float32) * 0.1).astype(dtype)

        out = jax.block_until_ready(dwconv_pallas(x, weight, bias, H, W, **kw))
        ref = dwconv_reference(x.astype(jnp.float32), weight.astype(jnp.float32),
                               bias.astype(jnp.float32), H, W)
        assert out.shape == (B, N, C)
        assert jnp.allclose(out.astype(jnp.float32), ref, atol=atol, rtol=rtol), (
            f"mismatch vs reference (case={case_id}, C={C}, H={H}, W={W}, dtype={dtype})")

    # 1) Small, full-C block path (C < 128), batch folding active, single row tile.
    run_case(1, B=2, C=32, H=8, W=8, dtype=jnp.float32, atol=1e-4, rtol=1e-4)
    # 2) Lane-dense path: channels tiled into 128-wide blocks, grid over n_c=2.
    run_case(2, B=2, C=256, H=16, W=8, dtype=jnp.float32, atol=1e-4, rtol=1e-4)
    # 3) bf16 I/O (halved HBM traffic), f32 accumulation inside the kernel.
    run_case(3, B=2, C=32, H=8, W=8, dtype=jnp.bfloat16, atol=5e-2, rtol=5e-2)
    # 4) Forced row tiling (Th=2, n_h=4): exercises the 1-row halo fetched from the
    #    neighbouring tile, the clamped/masked border rows, and the batch grid axis.
    run_case(4, B=2, C=32, H=8, W=8, dtype=jnp.float32, atol=1e-4, rtol=1e-4,
             row_tile_target_bytes=2048)
    # 5) C > 128 but not a multiple of 128 -> full-C block path.
    run_case(5, B=1, C=192, H=8, W=8, dtype=jnp.float32, atol=1e-4, rtol=1e-4)

    print("KERNEL_OK")
</pallas_src>

<mosaic_0001>
module attributes {stable_mosaic.version = 11 : i64} {
  func.func @dwconv_kernel(%arg0: i32, %arg1: i32, %arg2: i32, %arg3: memref<2x8x8x32xf32, #tpu.memory_space<vmem>>, %arg4: memref<2x1x8x32xf32, #tpu.memory_space<vmem>>, %arg5: memref<2x1x8x32xf32, #tpu.memory_space<vmem>>, %arg6: memref<9x32xf32, #tpu.memory_space<vmem>>, %arg7: memref<1x32xf32, #tpu.memory_space<vmem>>, %arg8: memref<2x8x8x32xf32, #tpu.memory_space<vmem>>) attributes {dimension_semantics = [#tpu.dimension_semantics<parallel>, #tpu.dimension_semantics<parallel>, #tpu.dimension_semantics<parallel>], iteration_bounds = array<i64: 1, 1, 1>, scalar_prefetch = 0 : i64, scratch_operands = 0 : i64, tpu.core_type = #tpu.core_type<tc>, window_params = [{transform_indices = @transform_0, window_bounds = array<i64: 2, 8, 8, 32>}, {transform_indices = @transform_1, window_bounds = array<i64: 2, 1, 8, 32>}, {transform_indices = @transform_2, window_bounds = array<i64: 2, 1, 8, 32>}, {transform_indices = @transform_3, window_bounds = array<i64: 9, 32>}, {transform_indices = @transform_4, window_bounds = array<i64: 1, 32>}, {transform_indices = @transform_5, window_bounds = array<i64: 2, 8, 8, 32>}]} {
    %c0 = arith.constant 0 : index
    %c0_0 = arith.constant 0 : index
    %c0_1 = arith.constant 0 : index
    %c0_2 = arith.constant 0 : index
    %0 = vector.load %arg3[%c0, %c0_0, %c0_1, %c0_2] : memref<2x8x8x32xf32, #tpu.memory_space<vmem>>, vector<2x8x8x32xf32>
    %c0_i32 = arith.constant 0 : i32
    %1 = arith.cmpi sgt, %arg2, %c0_i32 : i32
    %2 = arith.extui %1 : i1 to i32
    %3 = arith.sitofp %2 : i32 to f32
    %c0_i32_3 = arith.constant 0 : i32
    %4 = arith.cmpi slt, %arg2, %c0_i32_3 : i32
    %5 = arith.extui %4 : i1 to i32
    %6 = arith.sitofp %5 : i32 to f32
    %c0_4 = arith.constant 0 : index
    %c0_5 = arith.constant 0 : index
    %c0_6 = arith.constant 0 : index
    %c0_7 = arith.constant 0 : index
    %7 = vector.load %arg4[%c0_4, %c0_5, %c0_6, %c0_7] : memref<2x1x8x32xf32, #tpu.memory_space<vmem>>, vector<2x1x8x32xf32>
    %8 = vector.broadcast %3 : f32 to vector<2x1x8x32xf32>
    %9 = arith.mulf %7, %8 : vector<2x1x8x32xf32>
    %c0_8 = arith.constant 0 : index
    %c0_9 = arith.constant 0 : index
    %c0_10 = arith.constant 0 : index
    %c0_11 = arith.constant 0 : index
    %10 = vector.load %arg5[%c0_8, %c0_9, %c0_10, %c0_11] : memref<2x1x8x32xf32, #tpu.memory_space<vmem>>, vector<2x1x8x32xf32>
    %11 = vector.broadcast %6 : f32 to vector<2x1x8x32xf32>
    %12 = arith.mulf %10, %11 : vector<2x1x8x32xf32>
    %13 = vector.extract_strided_slice %0 {offsets = [0, 0, 0, 0], sizes = [2, 7, 8, 32], strides = [1, 1, 1, 1]} : vector<2x8x8x32xf32> to vector<2x7x8x32xf32>
    %14 = tpu.concatenate %9, %13 in 1 : vector<2x1x8x32xf32>, vector<2x7x8x32xf32> -> vector<2x8x8x32xf32>
    %15 = vector.extract_strided_slice %0 {offsets = [0, 1, 0, 0], sizes = [2, 7, 8, 32], strides = [1, 1, 1, 1]} : vector<2x8x8x32xf32> to vector<2x7x8x32xf32>
    %16 = tpu.concatenate %15, %12 in 1 : vector<2x7x8x32xf32>, vector<2x1x8x32xf32> -> vector<2x8x8x32xf32>
    %c0_12 = arith.constant 0 : index
    %c0_13 = arith.constant 0 : index
    %17 = vector.load %arg6[%c0_12, %c0_13] : memref<9x32xf32, #tpu.memory_space<vmem>>, vector<1x32xf32>
    %18 = vector.shape_cast %17 : vector<1x32xf32> to vector<32xf32>
    %c1 = arith.constant 1 : index
    %c0_14 = arith.constant 0 : index
    %19 = vector.load %arg6[%c1, %c0_14] : memref<9x32xf32, #tpu.memory_space<vmem>>, vector<1x32xf32>
    %20 = vector.shape_cast %19 : vector<1x32xf32> to vector<32xf32>
    %c2 = arith.constant 2 : index
    %c0_15 = arith.constant 0 : index
    %21 = vector.load %arg6[%c2, %c0_15] : memref<9x32xf32, #tpu.memory_space<vmem>>, vector<1x32xf32>
    %22 = vector.shape_cast %21 : vector<1x32xf32> to vector<32xf32>
    %c3 = arith.constant 3 : index
    %c0_16 = arith.constant 0 : index
    %23 = vector.load %arg6[%c3, %c0_16] : memref<9x32xf32, #tpu.memory_space<vmem>>, vector<1x32xf32>
    %24 = vector.shape_cast %23 : vector<1x32xf32> to vector<32xf32>
    %c4 = arith.constant 4 : index
    %c0_17 = arith.constant 0 : index
    %25 = vector.load %arg6[%c4, %c0_17] : memref<9x32xf32, #tpu.memory_space<vmem>>, vector<1x32xf32>
    %26 = vector.shape_cast %25 : vector<1x32xf32> to vector<32xf32>
    %c5 = arith.constant 5 : index
    %c0_18 = arith.constant 0 : index
    %27 = vector.load %arg6[%c5, %c0_18] : memref<9x32xf32, #tpu.memory_space<vmem>>, vector<1x32xf32>
    %28 = vector.shape_cast %27 : vector<1x32xf32> to vector<32xf32>
    %c6 = arith.constant 6 : index
    %c0_19 = arith.constant 0 : index
    %29 = vector.load %arg6[%c6, %c0_19] : memref<9x32xf32, #tpu.memory_space<vmem>>, vector<1x32xf32>
    %30 = vector.shape_cast %29 : vector<1x32xf32> to vector<32xf32>
    %c7 = arith.constant 7 : index
    %c0_20 = arith.constant 0 : index
    %31 = vector.load %arg6[%c7, %c0_20] : memref<9x32xf32, #tpu.memory_space<vmem>>, vector<1x32xf32>
    %32 = vector.shape_cast %31 : vector<1x32xf32> to vector<32xf32>
    %c8 = arith.constant 8 : index
    %c0_21 = arith.constant 0 : index
    %33 = vector.load %arg6[%c8, %c0_21] : memref<9x32xf32, #tpu.memory_space<vmem>>, vector<1x32xf32>
    %34 = vector.shape_cast %33 : vector<1x32xf32> to vector<32xf32>
    %35 = vector.shape_cast %18 : vector<32xf32> to vector<1x1x1x32xf32>
    %36 = vector.broadcast %35 : vector<1x1x1x32xf32> to vector<2x8x8x32xf32>
    %37 = arith.mulf %14, %36 : vector<2x8x8x32xf32>
    %38 = vector.shape_cast %24 : vector<32xf32> to vector<1x1x1x32xf32>
    %39 = vector.broadcast %38 : vector<1x1x1x32xf32> to vector<2x8x8x32xf32>
    %40 = arith.mulf %0, %39 : vector<2x8x8x32xf32>
    %41 = arith.addf %37, %40 : vector<2x8x8x32xf32>
    %42 = vector.shape_cast %30 : vector<32xf32> to vector<1x1x1x32xf32>
    %43 = vector.broadcast %42 : vector<1x1x1x32xf32> to vector<2x8x8x32xf32>
    %44 = arith.mulf %16, %43 : vector<2x8x8x32xf32>
    %45 = arith.addf %41, %44 : vector<2x8x8x32xf32>
    %46 = vector.shape_cast %20 : vector<32xf32> to vector<1x1x1x32xf32>
    %47 = vector.broadcast %46 : vector<1x1x1x32xf32> to vector<2x8x8x32xf32>
    %48 = arith.mulf %14, %47 : vector<2x8x8x32xf32>
    %49 = vector.shape_cast %26 : vector<32xf32> to vector<1x1x1x32xf32>
    %50 = vector.broadcast %49 : vector<1x1x1x32xf32> to vector<2x8x8x32xf32>
    %51 = arith.mulf %0, %50 : vector<2x8x8x32xf32>
    %52 = arith.addf %48, %51 : vector<2x8x8x32xf32>
    %53 = vector.shape_cast %32 : vector<32xf32> to vector<1x1x1x32xf32>
    %54 = vector.broadcast %53 : vector<1x1x1x32xf32> to vector<2x8x8x32xf32>
    %55 = arith.mulf %16, %54 : vector<2x8x8x32xf32>
    %56 = arith.addf %52, %55 : vector<2x8x8x32xf32>
    %57 = vector.shape_cast %22 : vector<32xf32> to vector<1x1x1x32xf32>
    %58 = vector.broadcast %57 : vector<1x1x1x32xf32> to vector<2x8x8x32xf32>
    %59 = arith.mulf %14, %58 : vector<2x8x8x32xf32>
    %60 = vector.shape_cast %28 : vector<32xf32> to vector<1x1x1x32xf32>
    %61 = vector.broadcast %60 : vector<1x1x1x32xf32> to vector<2x8x8x32xf32>
    %62 = arith.mulf %0, %61 : vector<2x8x8x32xf32>
    %63 = arith.addf %59, %62 : vector<2x8x8x32xf32>
    %64 = vector.shape_cast %34 : vector<32xf32> to vector<1x1x1x32xf32>
    %65 = vector.broadcast %64 : vector<1x1x1x32xf32> to vector<2x8x8x32xf32>
    %66 = arith.mulf %16, %65 : vector<2x8x8x32xf32>
    %67 = arith.addf %63, %66 : vector<2x8x8x32xf32>
    %68 = tpu.iota {dimensions = array<i32: 2>} : vector<1x1x8x32xi32>
    %c0_i32_22 = arith.constant 0 : i32
    %69 = vector.broadcast %c0_i32_22 : i32 to vector<1x1x8x32xi32>
    %70 = arith.cmpi sgt, %68, %69 : vector<1x1x8x32xi32>
    %c1_i32 = arith.constant 1 : i32
    %71 = tpu.dynamic_rotate %45 by %c1_i32 dim 2 : vector<2x8x8x32xf32>, i32 -> vector<2x8x8x32xf32>
    %cst = arith.constant 0.000000e+00 : f32
    %72 = vector.shape_cast %70 : vector<1x1x8x32xi1> to vector<1x1x8x32xi1>
    %73 = vector.broadcast %72 : vector<1x1x8x32xi1> to vector<2x8x8x32xi1>
    %74 = vector.broadcast %cst : f32 to vector<2x8x8x32xf32>
    %75 = arith.select %73, %71, %74 : vector<2x8x8x32xi1>, vector<2x8x8x32xf32>
    %c7_i32 = arith.constant 7 : i32
    %76 = vector.broadcast %c7_i32 : i32 to vector<1x1x8x32xi32>
    %77 = arith.cmpi slt, %68, %76 : vector<1x1x8x32xi32>
    %c7_i32_23 = arith.constant 7 : i32
    %78 = tpu.dynamic_rotate %67 by %c7_i32_23 dim 2 : vector<2x8x8x32xf32>, i32 -> vector<2x8x8x32xf32>
    %cst_24 = arith.constant 0.000000e+00 : f32
    %79 = vector.shape_cast %77 : vector<1x1x8x32xi1> to vector<1x1x8x32xi1>
    %80 = vector.broadcast %79 : vector<1x1x8x32xi1> to vector<2x8x8x32xi1>
    %81 = vector.broadcast %cst_24 : f32 to vector<2x8x8x32xf32>
    %82 = arith.select %80, %78, %81 : vector<2x8x8x32xi1>, vector<2x8x8x32xf32>
    %83 = arith.addf %56, %75 : vector<2x8x8x32xf32>
    %84 = arith.addf %83, %82 : vector<2x8x8x32xf32>
    %c0_25 = arith.constant 0 : index
    %c0_26 = arith.constant 0 : index
    %85 = vector.load %arg7[%c0_25, %c0_26] : memref<1x32xf32, #tpu.memory_space<vmem>>, vector<1x32xf32>
    %86 = vector.shape_cast %85 : vector<1x32xf32> to vector<32xf32>
    %87 = vector.shape_cast %86 : vector<32xf32> to vector<1x1x1x32xf32>
    %88 = vector.broadcast %87 : vector<1x1x1x32xf32> to vector<2x8x8x32xf32>
    %89 = arith.addf %84, %88 : vector<2x8x8x32xf32>
    %c0_27 = arith.constant 0 : index
    %c0_28 = arith.constant 0 : index
    %c0_29 = arith.constant 0 : index
    %c0_30 = arith.constant 0 : index
    %90 = vector.load %arg8[%c0_27, %c0_28, %c0_29, %c0_30] : memref<2x8x8x32xf32, #tpu.memory_space<vmem>>, vector<2x8x8x32xf32>
    tpu.vector_store %arg8[%c0_27, %c0_28, %c0_29, %c0_30], %89 {strides = array<i32>} : memref<2x8x8x32xf32, #tpu.memory_space<vmem>>, vector<2x8x8x32xf32>,
    return
  }
  func.func @transform_0(%arg0: i32, %arg1: i32, %arg2: i32) -> (i32, i32, i32, i32) {
    %c0_i32 = arith.constant 0 : i32
    %c0_i32_0 = arith.constant 0 : i32
    return %arg1, %arg2, %c0_i32, %arg0 : i32, i32, i32, i32
  }
  func.func @transform_1(%arg0: i32, %arg1: i32, %arg2: i32) -> (i32, i32, i32, i32) {
    %c8_i32 = arith.constant 8 : i32
    %0 = arith.muli %arg2, %c8_i32 : i32
    %c1_i32 = arith.constant 1 : i32
    %1 = arith.subi %0, %c1_i32 : i32
    %c0_i32 = arith.constant 0 : i32
    %2 = arith.maxsi %1, %c0_i32 : i32
    %c0_i32_0 = arith.constant 0 : i32
    %c0_i32_1 = arith.constant 0 : i32
    return %arg1, %2, %c0_i32_0, %arg0 : i32, i32, i32, i32
  }
  func.func @transform_2(%arg0: i32, %arg1: i32, %arg2: i32) -> (i32, i32, i32, i32) {
    %c1_i32 = arith.constant 1 : i32
    %0 = arith.addi %arg2, %c1_i32 : i32
    %c8_i32 = arith.constant 8 : i32
    %1 = arith.muli %0, %c8_i32 : i32
    %c7_i32 = arith.constant 7 : i32
    %2 = arith.minsi %1, %c7_i32 : i32
    %c0_i32 = arith.constant 0 : i32
    %c0_i32_0 = arith.constant 0 : i32
    return %arg1, %2, %c0_i32, %arg0 : i32, i32, i32, i32
  }
  func.func @transform_3(%arg0: i32, %arg1: i32, %arg2: i32) -> (i32, i32) {
    %c0_i32 = arith.constant 0 : i32
    %c0_i32_0 = arith.constant 0 : i32
    return %c0_i32, %arg0 : i32, i32
  }
  func.func @transform_4(%arg0: i32, %arg1: i32, %arg2: i32) -> (i32, i32) {
    %c0_i32 = arith.constant 0 : i32
    %c0_i32_0 = arith.constant 0 : i32
    return %c0_i32, %arg0 : i32, i32
  }
  func.func @transform_5(%arg0: i32, %arg1: i32, %arg2: i32) -> (i32, i32, i32, i32) {
    %c0_i32 = arith.constant 0 : i32
    %c0_i32_0 = arith.constant 0 : i32
    return %arg1, %arg2, %c0_i32, %arg0 : i32, i32, i32, i32
  }
}

</mosaic_0001>

<llo_original>
// kernel: tpu_custom_call.1
$region0: #{tpu_custom_call.1}
  #allocation0 [shape = 'u32[]', space=smem, size = 0x4, offset = 0x4, fixed_abs, tag = 'smem constant byte address 0x4 - core index']
  #allocation1 [shape = 'u32[72,128]{1,0:T(1,128)}', space=vmem, size = 0x9000, scoped, tag = 'internal scratch']
  %s0 = inlined_call_operand.hbm [shape: f32[2,8,8,32], index: 0, kind: input, shape index: {}]
  %s1 = inlined_call_operand.hbm [shape: f32[2,8,8,32], index: 1, kind: input, shape index: {}]
  %s2 = inlined_call_operand.hbm [shape: f32[2,8,8,32], index: 2, kind: input, shape index: {}]
  %s3 = inlined_call_operand.hbm [shape: f32[9,32], index: 3, kind: input, shape index: {}]
  %s4 = inlined_call_operand.vmem [shape: f32[1,32], index: 4, kind: input, shape index: {}]
  %s5 = inlined_call_operand.hbm [shape: f32[2,8,8,32], index: 5, kind: output, shape index: {}]
  %s6 = sld [smem:[#allocation0]]
  $region46: #{tpu_custom_call.1} parent=0
    _
  %s8 = ssub.s32 1, %s6
  %s9 = scalar_select 0, %s8, %s6
  $region1: #{tpu_custom_call.1} parent=0
    #allocation2 [shape = 'u8[65536]{0}', space=vmem, size = 0x10000, scoped, tag = 'input window, operand 0, single buffered']
    #allocation3 [shape = 's32[1]{0}', space=sflag, size = 0x4, scoped, tag = 'scoped memory for tpu_custom_call.1']
    #allocation4 [shape = 's32[1]{0}', space=sflag, size = 0x4, scoped, tag = 'scoped memory for tpu_custom_call.1']
    #allocation5 [shape = 'u8[8192]{0}', space=vmem, size = 0x2000, scoped, tag = 'input window, operand 1, single buffered']
    #allocation6 [shape = 's32[1]{0}', space=sflag, size = 0x4, scoped, tag = 'scoped memory for tpu_custom_call.1']
    #allocation7 [shape = 'u8[8192]{0}', space=vmem, size = 0x2000, scoped, tag = 'input window, operand 2, single buffered']
    #allocation8 [shape = 'u8[8192]{0}', space=vmem, size = 0x2000, scoped, tag = 'input window, operand 3, single buffered']
    #allocation9 [shape = 's32[1]{0}', space=sflag, size = 0x4, scoped, tag = 'scoped memory for tpu_custom_call.1']
    #allocation10 [shape = 'u8[65536]{0}', space=vmem, size = 0x10000, scoped, tag = 'output window, operand 0, single buffered']
    %10 = vsyncpa [#allocation3], 0
    %11 = vsyncpa [#allocation6], 0
    %12 = vsyncpa [#allocation9], 0
    %13 = vsyncpa [#allocation4], 0
    // Predicated region
    $region2: #{tpu_custom_call.1} parent=1 // pred_check
      _
    $region3: #{tpu_custom_call.1} parent=1 // pred_check_branch
      %15 = sbr.rel (0) target = $region5
    $region4: #{tpu_custom_call.1} parent=1 // pred_region
      %17 = vsyncadd [#allocation3], 0
      %s18 = sshll.u32 %s0, 4
      %s19 = int_to_ptr.hbm [resolvable:$true] %s18
      %s20 = sshll.u32 [#allocation2], 4
      %s21 = int_to_ptr.vmem [resolvable:$true] %s20
      %26 = dma.hbm_to_vmem [thread:$0]  %s19, 2048, %s21, [#allocation3], 128, 128, 8
    $region5: #{tpu_custom_call.1} parent=1 // pred_fallthru
      _
    // Predicated region
    $region6: #{tpu_custom_call.1} parent=1 // pred_check
      _
    $region7: #{tpu_custom_call.1} parent=1 // pred_check_branch
      %28 = sbr.rel (0) target = $region9
    $region8: #{tpu_custom_call.1} parent=1 // pred_region
      %s29 = smul.u32 0, 8
      %s30 = ssub.s32 %s29, 1
      %p31 = scmp.gt.s32.totalorder %s30, 0
      %s32 = scalar_select %p31, %s30, 0
      %34 = vsyncadd [#allocation6], 0
      %s35 = smul.addr %s32, 8
      %s36 = scalar_lea.hbm %s1, %s35
      %s37 = sshll.u32 %s36, 4
      %s38 = int_to_ptr.hbm [resolvable:$true] %s37
      %s39 = sshll.u32 [#allocation5], 4
      %s40 = int_to_ptr.vmem [resolvable:$true] %s39
      %45 = dma.hbm_to_vmem [thread:$0]  %s38, 256, %s40, [#allocation6], 1024, 128, 8
    $region9: #{tpu_custom_call.1} parent=1 // pred_fallthru
      _
    // Predicated region
    $region10: #{tpu_custom_call.1} parent=1 // pred_check
      _
    $region11: #{tpu_custom_call.1} parent=1 // pred_check_branch
      %47 = sbr.rel (0) target = $region13
    $region12: #{tpu_custom_call.1} parent=1 // pred_region
      %s48 = sadd.s32 0, 1
      %s49 = smul.u32 %s48, 8
      %p50 = scmp.lt.s32.totalorder %s49, 7
      %s51 = scalar_select %p50, %s49, 7
      %53 = vsyncadd [#allocation6], 0
      %s54 = smul.addr %s51, 8
      %s55 = scalar_lea.hbm %s2, %s54
      %s56 = sshll.u32 %s55, 4
      %s57 = int_to_ptr.hbm [resolvable:$true] %s56
      %s58 = sshll.u32 [#allocation7], 4
      %s59 = int_to_ptr.vmem [resolvable:$true] %s58
      %64 = dma.hbm_to_vmem [thread:$0]  %s57, 256, %s59, [#allocation6], 1024, 128, 8
    $region13: #{tpu_custom_call.1} parent=1 // pred_fallthru
      _
    // Predicated region
    $region14: #{tpu_custom_call.1} parent=1 // pred_check
      _
    $region15: #{tpu_custom_call.1} parent=1 // pred_check_branch
      %66 = sbr.rel (0) target = $region17
    $region16: #{tpu_custom_call.1} parent=1 // pred_region
      %68 = vsyncadd [#allocation9], 0
      %s69 = sshll.u32 %s3, 4
      %s70 = int_to_ptr.hbm [resolvable:$true] %s69
      %s71 = sshll.u32 [#allocation8], 4
      %s72 = int_to_ptr.vmem [resolvable:$true] %s71
      %77 = dma.hbm_to_vmem [thread:$0]  %s70, 256, %s72, [#allocation9], 128, 128, 8
    $region17: #{tpu_custom_call.1} parent=1 // pred_fallthru
      _
    // Predicated region
    $region18: #{tpu_custom_call.1} parent=1 // pred_check
      _
    $region19: #{tpu_custom_call.1} parent=1 // pred_check_branch
      %79 = sbr.rel (0) target = $region21
    $region20: #{tpu_custom_call.1} parent=1 // pred_region
      _
    $region21: #{tpu_custom_call.1} parent=1 // pred_fallthru
      _
    // Predicated region
    $region22: #{tpu_custom_call.1} parent=1 // pred_check
      _
    $region23: #{tpu_custom_call.1} parent=1 // pred_check_branch
      %81 = sbr.rel (0) target = $region25
    $region24: #{tpu_custom_call.1} parent=1 // pred_region
      %83 = dma.done [#allocation3], 2048
    $region25: #{tpu_custom_call.1} parent=1 // pred_fallthru
      _
    // Predicated region
    $region26: #{tpu_custom_call.1} parent=1 // pred_check
      _
    $region27: #{tpu_custom_call.1} parent=1 // pred_check_branch
      %85 = sbr.rel (0) target = $region29
    $region28: #{tpu_custom_call.1} parent=1 // pred_region
      %87 = dma.done [#allocation6], 256
    $region29: #{tpu_custom_call.1} parent=1 // pred_fallthru
      _
    // Predicated region
    $region30: #{tpu_custom_call.1} parent=1 // pred_check
      _
    $region31: #{tpu_custom_call.1} parent=1 // pred_check_branch
      %89 = sbr.rel (0) target = $region33
    $region32: #{tpu_custom_call.1} parent=1 // pred_region
      %91 = dma.done [#allocation6], 256
    $region33: #{tpu_custom_call.1} parent=1 // pred_fallthru
      _
    // Predicated region
    $region34: #{tpu_custom_call.1} parent=1 // pred_check
      _
    $region35: #{tpu_custom_call.1} parent=1 // pred_check_branch
      %93 = sbr.rel (0) target = $region37
    $region36: #{tpu_custom_call.1} parent=1 // pred_region
      %95 = dma.done [#allocation9], 256
    $region37: #{tpu_custom_call.1} parent=1 // pred_fallthru
      _
    %s96 = smul.u32 0, 8
    %s97 = ssub.s32 %s96, 1
    %p98 = scmp.gt.s32.totalorder %s97, 0
    %s99 = scalar_select %p98, %s97, 0
    %s100 = sadd.s32 0, 1
    %s101 = smul.u32 %s100, 8
    %p102 = scmp.lt.s32.totalorder %s101, 7
    %s103 = scalar_select %p102, %s101, 7
    %v104 = vld [vmem:[#allocation2] sm:$0xff]
    %v105 = vld [vmem:[#allocation2 + $0x8] sm:$0xff]
    %v106 = vld [vmem:[#allocation2 + $0x10] sm:$0xff]
    %v107 = vld [vmem:[#allocation2 + $0x18] sm:$0xff]
    %v108 = vld [vmem:[#allocation2 + $0x20] sm:$0xff]
    %v109 = vld [vmem:[#allocation2 + $0x28] sm:$0xff]
    %v110 = vld [vmem:[#allocation2 + $0x30] sm:$0xff]
    %v111 = vld [vmem:[#allocation2 + $0x38] sm:$0xff]
    %v112 = vld [vmem:[#allocation2 + $0x40] sm:$0xff]
    %v113 = vld [vmem:[#allocation2 + $0x48] sm:$0xff]
    %v114 = vld [vmem:[#allocation2 + $0x50] sm:$0xff]
    %v115 = vld [vmem:[#allocation2 + $0x58] sm:$0xff]
    %v116 = vld [vmem:[#allocation2 + $0x60] sm:$0xff]
    %v117 = vld [vmem:[#allocation2 + $0x68] sm:$0xff]
    %v118 = vld [vmem:[#allocation2 + $0x70] sm:$0xff]
    %v119 = vld [vmem:[#allocation2 + $0x78] sm:$0xff]
    %p120 = scmp.gt.s32.totalorder 0, 0
    %s121 = scalar_select %p120, 1, 0
    %s122 = scvt.s32.f32 %s121
    %p123 = scmp.lt.s32.totalorder 0, 0
    %s124 = scalar_select %p123, 1, 0
    %s125 = scvt.s32.f32 %s124
    %v126 = vld [vmem:[#allocation5] sm:$0xff]
    %v127 = vld [vmem:[#allocation5 + $0x8] sm:$0xff]
    %v128 = vstv %s122
    %v129 = vmul.f32 %v126, %v128
    %v130 = vmul.f32 %v127, %v128
    %v131 = vld [vmem:[#allocation7] sm:$0xff]
    %v132 = vld [vmem:[#allocation7 + $0x8] sm:$0xff]
    %v133 = vstv %s125
    %v134 = vmul.f32 %v131, %v133
    %v135 = vmul.f32 %v132, %v133
    %v136 = vld [vmem:[#allocation8] sm:$0x1]
    %v137 = vld [vmem:[#allocation8 + $0x1] sm:$0x1]
    %v138 = vld [vmem:[#allocation8 + $0x2] sm:$0x1]
    %v139 = vld [vmem:[#allocation8 + $0x3] sm:$0x1]
    %v140 = vld [vmem:[#allocation8 + $0x4] sm:$0x1]
    %v141 = vld [vmem:[#allocation8 + $0x5] sm:$0x1]
    %v142 = vld [vmem:[#allocation8 + $0x6] sm:$0x1]
    %v143 = vld [vmem:[#allocation8 + $0x7] sm:$0x1]
    %v144 = vld [vmem:[#allocation8 + $0x8] sm:$0x1]
    %v145 = vperm.slane %v136, 0
    %v146 = vmul.f32 %v129, %v145
    %v147 = vmul.f32 %v104, %v145
    %v148 = vmul.f32 %v105, %v145
    %v149 = vmul.f32 %v106, %v145
    %v150 = vmul.f32 %v107, %v145
    %v151 = vmul.f32 %v108, %v145
    %v152 = vmul.f32 %v109, %v145
    %v153 = vmul.f32 %v110, %v145
    %v154 = vmul.f32 %v130, %v145
    %v155 = vmul.f32 %v112, %v145
    %v156 = vmul.f32 %v113, %v145
    %v157 = vmul.f32 %v114, %v145
    %v158 = vmul.f32 %v115, %v145
    %v159 = vmul.f32 %v116, %v145
    %v160 = vmul.f32 %v117, %v145
    %v161 = vmul.f32 %v118, %v145
    %v162 = vperm.slane %v139, 0
    %v163 = vmul.f32 %v104, %v162
    %v164 = vmul.f32 %v105, %v162
    %v165 = vmul.f32 %v106, %v162
    %v166 = vmul.f32 %v107, %v162
    %v167 = vmul.f32 %v108, %v162
    %v168 = vmul.f32 %v109, %v162
    %v169 = vmul.f32 %v110, %v162
    %v170 = vmul.f32 %v111, %v162
    %v171 = vmul.f32 %v112, %v162
    %v172 = vmul.f32 %v113, %v162
    %v173 = vmul.f32 %v114, %v162
    %v174 = vmul.f32 %v115, %v162
    %v175 = vmul.f32 %v116, %v162
    %v176 = vmul.f32 %v117, %v162
    %v177 = vmul.f32 %v118, %v162
    %v178 = vmul.f32 %v119, %v162
    %v179 = vadd.f32 %v146, %v163
    %v180 = vadd.f32 %v147, %v164
    %v181 = vadd.f32 %v148, %v165
    %v182 = vadd.f32 %v149, %v166
    %v183 = vadd.f32 %v150, %v167
    %v184 = vadd.f32 %v151, %v168
    %v185 = vadd.f32 %v152, %v169
    %v186 = vadd.f32 %v153, %v170
    %v187 = vadd.f32 %v154, %v171
    %v188 = vadd.f32 %v155, %v172
    %v189 = vadd.f32 %v156, %v173
    %v190 = vadd.f32 %v157, %v174
    %v191 = vadd.f32 %v158, %v175
    %v192 = vadd.f32 %v159, %v176
    %v193 = vadd.f32 %v160, %v177
    %v194 = vadd.f32 %v161, %v178
    %v195 = vperm.slane %v142, 0
    %v196 = vmul.f32 %v105, %v195
    %v197 = vmul.f32 %v106, %v195
    %v198 = vmul.f32 %v107, %v195
    %v199 = vmul.f32 %v108, %v195
    %v200 = vmul.f32 %v109, %v195
    %v201 = vmul.f32 %v110, %v195
    %v202 = vmul.f32 %v111, %v195
    %v203 = vmul.f32 %v134, %v195
    %v204 = vmul.f32 %v113, %v195
    %v205 = vmul.f32 %v114, %v195
    %v206 = vmul.f32 %v115, %v195
    %v207 = vmul.f32 %v116, %v195
    %v208 = vmul.f32 %v117, %v195
    %v209 = vmul.f32 %v118, %v195
    %v210 = vmul.f32 %v119, %v195
    %v211 = vmul.f32 %v135, %v195
    %v212 = vadd.f32 %v179, %v196
    %v213 = vadd.f32 %v180, %v197
    %v214 = vadd.f32 %v181, %v198
    %v215 = vadd.f32 %v182, %v199
    %v216 = vadd.f32 %v183, %v200
    %v217 = vadd.f32 %v184, %v201
    %v218 = vadd.f32 %v185, %v202
    %v219 = vadd.f32 %v186, %v203
    %v220 = vadd.f32 %v187, %v204
    %v221 = vadd.f32 %v188, %v205
    %v222 = vadd.f32 %v189, %v206
    %v223 = vadd.f32 %v190, %v207
    %v224 = vadd.f32 %v191, %v208
    %v225 = vadd.f32 %v192, %v209
    %v226 = vadd.f32 %v193, %v210
    %v227 = vadd.f32 %v194, %v211
    %v228 = vperm.slane %v137, 0
    %v229 = vmul.f32 %v129, %v228
    %v230 = vmul.f32 %v104, %v228
    %v231 = vmul.f32 %v105, %v228
    %v232 = vmul.f32 %v106, %v228
    %v233 = vmul.f32 %v107, %v228
    %v234 = vmul.f32 %v108, %v228
    %v235 = vmul.f32 %v109, %v228
    %v236 = vmul.f32 %v110, %v228
    %v237 = vmul.f32 %v130, %v228
    %v238 = vmul.f32 %v112, %v228
    %v239 = vmul.f32 %v113, %v228
    %v240 = vmul.f32 %v114, %v228
    %v241 = vmul.f32 %v115, %v228
    %v242 = vmul.f32 %v116, %v228
    %v243 = vmul.f32 %v117, %v228
    %v244 = vmul.f32 %v118, %v228
    %v245 = vperm.slane %v140, 0
    %v246 = vmul.f32 %v104, %v245
    %v247 = vmul.f32 %v105, %v245
    %v248 = vmul.f32 %v106, %v245
    %v249 = vmul.f32 %v107, %v245
    %v250 = vmul.f32 %v108, %v245
    %v251 = vmul.f32 %v109, %v245
    %v252 = vmul.f32 %v110, %v245
    %v253 = vmul.f32 %v111, %v245
    %v254 = vmul.f32 %v112, %v245
    %v255 = vmul.f32 %v113, %v245
    %v256 = vmul.f32 %v114, %v245
    %v257 = vmul.f32 %v115, %v245
    %v258 = vmul.f32 %v116, %v245
    %v259 = vmul.f32 %v117, %v245
    %v260 = vmul.f32 %v118, %v245
    %v261 = vmul.f32 %v119, %v245
    %v262 = vadd.f32 %v229, %v246
    %v263 = vadd.f32 %v230, %v247
    %v264 = vadd.f32 %v231, %v248
    %v265 = vadd.f32 %v232, %v249
    %v266 = vadd.f32 %v233, %v250
    %v267 = vadd.f32 %v234, %v251
    %v268 = vadd.f32 %v235, %v252
    %v269 = vadd.f32 %v236, %v253
    %v270 = vadd.f32 %v237, %v254
    %v271 = vadd.f32 %v238, %v255
    %v272 = vadd.f32 %v239, %v256
    %v273 = vadd.f32 %v240, %v257
    %v274 = vadd.f32 %v241, %v258
    %v275 = vadd.f32 %v242, %v259
    %v276 = vadd.f32 %v243, %v260
    %v277 = vadd.f32 %v244, %v261
    %v278 = vperm.slane %v143, 0
    %v279 = vmul.f32 %v105, %v278
    %v280 = vmul.f32 %v106, %v278
    %v281 = vmul.f32 %v107, %v278
    %v282 = vmul.f32 %v108, %v278
    %v283 = vmul.f32 %v109, %v278
    %v284 = vmul.f32 %v110, %v278
    %v285 = vmul.f32 %v111, %v278
    %v286 = vmul.f32 %v134, %v278
    %v287 = vmul.f32 %v113, %v278
    %v288 = vmul.f32 %v114, %v278
    %v289 = vmul.f32 %v115, %v278
    %v290 = vmul.f32 %v116, %v278
    %v291 = vmul.f32 %v117, %v278
    %v292 = vmul.f32 %v118, %v278
    %v293 = vmul.f32 %v119, %v278
    %v294 = vmul.f32 %v135, %v278
    %v295 = vadd.f32 %v262, %v279
    %v296 = vadd.f32 %v263, %v280
    %v297 = vadd.f32 %v264, %v281
    %v298 = vadd.f32 %v265, %v282
    %v299 = vadd.f32 %v266, %v283
    %v300 = vadd.f32 %v267, %v284
    %v301 = vadd.f32 %v268, %v285
    %v302 = vadd.f32 %v269, %v286
    %v303 = vadd.f32 %v270, %v287
    %v304 = vadd.f32 %v271, %v288
    %v305 = vadd.f32 %v272, %v289
    %v306 = vadd.f32 %v273, %v290
    %v307 = vadd.f32 %v274, %v291
    %v308 = vadd.f32 %v275, %v292
    %v309 = vadd.f32 %v276, %v293
    %v310 = vadd.f32 %v277, %v294
    %v311 = vperm.slane %v138, 0
    %v312 = vmul.f32 %v129, %v311
    %v313 = vmul.f32 %v104, %v311
    %v314 = vmul.f32 %v105, %v311
    %v315 = vmul.f32 %v106, %v311
    %v316 = vmul.f32 %v107, %v311
    %v317 = vmul.f32 %v108, %v311
    %v318 = vmul.f32 %v109, %v311
    %v319 = vmul.f32 %v110, %v311
    %v320 = vmul.f32 %v130, %v311
    %v321 = vmul.f32 %v112, %v311
    %v322 = vmul.f32 %v113, %v311
    %v323 = vmul.f32 %v114, %v311
    %v324 = vmul.f32 %v115, %v311
    %v325 = vmul.f32 %v116, %v311
    %v326 = vmul.f32 %v117, %v311
    %v327 = vmul.f32 %v118, %v311
    %v328 = vperm.slane %v141, 0
    %v329 = vmul.f32 %v104, %v328
    %v330 = vmul.f32 %v105, %v328
    %v331 = vmul.f32 %v106, %v328
    %v332 = vmul.f32 %v107, %v328
    %v333 = vmul.f32 %v108, %v328
    %v334 = vmul.f32 %v109, %v328
    %v335 = vmul.f32 %v110, %v328
    %v336 = vmul.f32 %v111, %v328
    %v337 = vmul.f32 %v112, %v328
    %v338 = vmul.f32 %v113, %v328
    %v339 = vmul.f32 %v114, %v328
    %v340 = vmul.f32 %v115, %v328
    %v341 = vmul.f32 %v116, %v328
    %v342 = vmul.f32 %v117, %v328
    %v343 = vmul.f32 %v118, %v328
    %v344 = vmul.f32 %v119, %v328
    %v345 = vadd.f32 %v312, %v329
    %v346 = vadd.f32 %v313, %v330
    %v347 = vadd.f32 %v314, %v331
    %v348 = vadd.f32 %v315, %v332
    %v349 = vadd.f32 %v316, %v333
    %v350 = vadd.f32 %v317, %v334
    %v351 = vadd.f32 %v318, %v335
    %v352 = vadd.f32 %v319, %v336
    %v353 = vadd.f32 %v320, %v337
    %v354 = vadd.f32 %v321, %v338
    %v355 = vadd.f32 %v322, %v339
    %v356 = vadd.f32 %v323, %v340
    %v357 = vadd.f32 %v324, %v341
    %v358 = vadd.f32 %v325, %v342
    %v359 = vadd.f32 %v326, %v343
    %v360 = vadd.f32 %v327, %v344
    %v361 = vperm.slane %v144, 0
    %v362 = vmul.f32 %v105, %v361
    %v363 = vmul.f32 %v106, %v361
    %v364 = vmul.f32 %v107, %v361
    %v365 = vmul.f32 %v108, %v361
    %v366 = vmul.f32 %v109, %v361
    %v367 = vmul.f32 %v110, %v361
    %v368 = vmul.f32 %v111, %v361
    %v369 = vmul.f32 %v134, %v361
    %v370 = vmul.f32 %v113, %v361
    %v371 = vmul.f32 %v114, %v361
    %v372 = vmul.f32 %v115, %v361
    %v373 = vmul.f32 %v116, %v361
    %v374 = vmul.f32 %v117, %v361
    %v375 = vmul.f32 %v118, %v361
    %v376 = vmul.f32 %v119, %v361
    %v377 = vmul.f32 %v135, %v361
    %v378 = vadd.f32 %v345, %v362
    %v379 = vadd.f32 %v346, %v363
    %v380 = vadd.f32 %v347, %v364
    %v381 = vadd.f32 %v348, %v365
    %v382 = vadd.f32 %v349, %v366
    %v383 = vadd.f32 %v350, %v367
    %v384 = vadd.f32 %v351, %v368
    %v385 = vadd.f32 %v352, %v369
    %v386 = vadd.f32 %v353, %v370
    %v387 = vadd.f32 %v354, %v371
    %v388 = vadd.f32 %v355, %v372
    %v389 = vadd.f32 %v356, %v373
    %v390 = vadd.f32 %v357, %v374
    %v391 = vadd.f32 %v358, %v375
    %v392 = vadd.f32 %v359, %v376
    %v393 = vadd.f32 %v360, %v377
    %v394 = vlaneseq
    %v395 = vshrl.u32 %v394, 7
    %vm396 = vcmp.gt.s32.totalorder %v395, 0
    %v397 = vrot.slane %v212, 7
    %v398 = vrot.slane %v213, 7
    %v399 = vrot.slane %v214, 7
    %v400 = vrot.slane %v215, 7
    %v401 = vrot.slane %v216, 7
    %v402 = vrot.slane %v217, 7
    %v403 = vrot.slane %v218, 7
    %v404 = vrot.slane %v219, 7
    %v405 = vrot.slane %v220, 7
    %v406 = vrot.slane %v221, 7
    %v407 = vrot.slane %v222, 7
    %v408 = vrot.slane %v223, 7
    %v409 = vrot.slane %v224, 7
    %v410 = vrot.slane %v225, 7
    %v411 = vrot.slane %v226, 7
    %v412 = vrot.slane %v227, 7
    %v413 = vsel %vm396, 1, 0
    %vm414 = vcmp.eq.s32.totalorder %v413, 1
    %v415 = vsel %vm414, %v397, 0.0
    %v416 = vsel %vm414, %v398, 0.0
    %v417 = vsel %vm414, %v399, 0.0
    %v418 = vsel %vm414, %v400, 0.0
    %v419 = vsel %vm414, %v401, 0.0
    %v420 = vsel %vm414, %v402, 0.0
    %v421 = vsel %vm414, %v403, 0.0
    %v422 = vsel %vm414, %v404, 0.0
    %v423 = vsel %vm414, %v405, 0.0
    %v424 = vsel %vm414, %v406, 0.0
    %v425 = vsel %vm414, %v407, 0.0
    %v426 = vsel %vm414, %v408, 0.0
    %v427 = vsel %vm414, %v409, 0.0
    %v428 = vsel %vm414, %v410, 0.0
    %v429 = vsel %vm414, %v411, 0.0
    %v430 = vsel %vm414, %v412, 0.0
    %vm431 = vcmp.lt.s32.totalorder %v395, 7
    %v432 = vrot.slane %v378, 1
    %v433 = vrot.slane %v379, 1
    %v434 = vrot.slane %v380, 1
    %v435 = vrot.slane %v381, 1
    %v436 = vrot.slane %v382, 1
    %v437 = vrot.slane %v383, 1
    %v438 = vrot.slane %v384, 1
    %v439 = vrot.slane %v385, 1
    %v440 = vrot.slane %v386, 1
    %v441 = vrot.slane %v387, 1
    %v442 = vrot.slane %v388, 1
    %v443 = vrot.slane %v389, 1
    %v444 = vrot.slane %v390, 1
    %v445 = vrot.slane %v391, 1
    %v446 = vrot.slane %v392, 1
    %v447 = vrot.slane %v393, 1
    %v448 = vsel %vm431, 1, 0
    %vm449 = vcmp.eq.s32.totalorder %v448, 1
    %v450 = vsel %vm449, %v432, 0.0
    %v451 = vsel %vm449, %v433, 0.0
    %v452 = vsel %vm449, %v434, 0.0
    %v453 = vsel %vm449, %v435, 0.0
    %v454 = vsel %vm449, %v436, 0.0
    %v455 = vsel %vm449, %v437, 0.0
    %v456 = vsel %vm449, %v438, 0.0
    %v457 = vsel %vm449, %v439, 0.0
    %v458 = vsel %vm449, %v440, 0.0
    %v459 = vsel %vm449, %v441, 0.0
    %v460 = vsel %vm449, %v442, 0.0
    %v461 = vsel %vm449, %v443, 0.0
    %v462 = vsel %vm449, %v444, 0.0
    %v463 = vsel %vm449, %v445, 0.0
    %v464 = vsel %vm449, %v446, 0.0
    %v465 = vsel %vm449, %v447, 0.0
    %v466 = vadd.f32 %v295, %v415
    %v467 = vadd.f32 %v296, %v416
    %v468 = vadd.f32 %v297, %v417
    %v469 = vadd.f32 %v298, %v418
    %v470 = vadd.f32 %v299, %v419
    %v471 = vadd.f32 %v300, %v420
    %v472 = vadd.f32 %v301, %v421
    %v473 = vadd.f32 %v302, %v422
    %v474 = vadd.f32 %v303, %v423
    %v475 = vadd.f32 %v304, %v424
    %v476 = vadd.f32 %v305, %v425
    %v477 = vadd.f32 %v306, %v426
    %v478 = vadd.f32 %v307, %v427
    %v479 = vadd.f32 %v308, %v428
    %v480 = vadd.f32 %v309, %v429
    %v481 = vadd.f32 %v310, %v430
    %v482 = vadd.f32 %v466, %v450
    %v483 = vadd.f32 %v467, %v451
    %v484 = vadd.f32 %v468, %v452
    %v485 = vadd.f32 %v469, %v453
    %v486 = vadd.f32 %v470, %v454
    %v487 = vadd.f32 %v471, %v455
    %v488 = vadd.f32 %v472, %v456
    %v489 = vadd.f32 %v473, %v457
    %v490 = vadd.f32 %v474, %v458
    %v491 = vadd.f32 %v475, %v459
    %v492 = vadd.f32 %v476, %v460
    %v493 = vadd.f32 %v477, %v461
    %v494 = vadd.f32 %v478, %v462
    %v495 = vadd.f32 %v479, %v463
    %v496 = vadd.f32 %v480, %v464
    %v497 = vadd.f32 %v481, %v465
    %v498 = vld [vmem:[%s4] sm:$0x1]
    %v500 = vperm.slane %v498, 0
    %v502 = vadd.f32 %v482, %v500
    %v503 = vadd.f32 %v483, %v500
    %v504 = vadd.f32 %v484, %v500
    %v505 = vadd.f32 %v485, %v500
    %v506 = vadd.f32 %v486, %v500
    %v507 = vadd.f32 %v487, %v500
    %v508 = vadd.f32 %v488, %v500
    %v509 = vadd.f32 %v489, %v500
    %v510 = vadd.f32 %v490, %v500
    %v511 = vadd.f32 %v491, %v500
    %v512 = vadd.f32 %v492, %v500
    %v513 = vadd.f32 %v493, %v500
    %v514 = vadd.f32 %v494, %v500
    %v515 = vadd.f32 %v495, %v500
    %v516 = vadd.f32 %v496, %v500
    %v517 = vadd.f32 %v497, %v500
    %vm518 = vcmask 261120
    %519 = vst.msk [vmem:[#allocation10] sm:$0xff] %vm518, %v502
    %520 = vst.msk [vmem:[#allocation10 + $0x8] sm:$0xff] %vm518, %v503
    %521 = vst.msk [vmem:[#allocation10 + $0x10] sm:$0xff] %vm518, %v504
    %522 = vst.msk [vmem:[#allocation10 + $0x18] sm:$0xff] %vm518, %v505
    %523 = vst.msk [vmem:[#allocation10 + $0x20] sm:$0xff] %vm518, %v506
    %524 = vst.msk [vmem:[#allocation10 + $0x28] sm:$0xff] %vm518, %v507
    %525 = vst.msk [vmem:[#allocation10 + $0x30] sm:$0xff] %vm518, %v508
    %526 = vst.msk [vmem:[#allocation10 + $0x38] sm:$0xff] %vm518, %v509
    %527 = vst.msk [vmem:[#allocation10 + $0x40] sm:$0xff] %vm518, %v510
    %528 = vst.msk [vmem:[#allocation10 + $0x48] sm:$0xff] %vm518, %v511
    %529 = vst.msk [vmem:[#allocation10 + $0x50] sm:$0xff] %vm518, %v512
    %530 = vst.msk [vmem:[#allocation10 + $0x58] sm:$0xff] %vm518, %v513
    %531 = vst.msk [vmem:[#allocation10 + $0x60] sm:$0xff] %vm518, %v514
    %532 = vst.msk [vmem:[#allocation10 + $0x68] sm:$0xff] %vm518, %v515
    %533 = vst.msk [vmem:[#allocation10 + $0x70] sm:$0xff] %vm518, %v516
    %534 = vst.msk [vmem:[#allocation10 + $0x78] sm:$0xff] %vm518, %v517
    // Predicated region
    $region38: #{tpu_custom_call.1} parent=1 // pred_check
      _
    $region39: #{tpu_custom_call.1} parent=1 // pred_check_branch
      %536 = sbr.rel (0) target = $region41
    $region40: #{tpu_custom_call.1} parent=1 // pred_region
      %538 = vsyncadd [#allocation4], 0
      %s539 = sshll.u32 [#allocation10], 4
      %s540 = int_to_ptr.vmem [resolvable:$true] %s539
      %s541 = sshll.u32 %s5, 4
      %s542 = int_to_ptr.hbm [resolvable:$true] %s541
      %547 = dma.vmem_to_hbm [thread:$0]  %s540, 2048, %s542, [#allocation4], 128, 128, 8
    $region41: #{tpu_custom_call.1} parent=1 // pred_fallthru
      _
    // Predicated region
    $region42: #{tpu_custom_call.1} parent=1 // pred_check
      _
    $region43: #{tpu_custom_call.1} parent=1 // pred_check_branch
      %549 = sbr.rel (0) target = $region45
    $region44: #{tpu_custom_call.1} parent=1 // pred_region
      %551 = dma.done [#allocation4], 2048
    $region45: #{tpu_custom_call.1} parent=1 // pred_fallthru
      _
    %552 = vsyncpa [#allocation3], 1
    %553 = vsyncpa [#allocation6], 1
    %554 = vsyncpa [#allocation9], 1
    %555 = vsyncpa [#allocation4], 1

</llo_original>
